<compile_context>
chip_gen: v6e
topology: v6e:2x2x1
jax: 0.10.0
libtpu: 0.0.40
codegen_flags: <defaults>
</compile_context>

<pallas_src>
import numpy as np
import jax
import jax.numpy as jnp
from jax.experimental import pallas as pl
from jax.experimental.pallas import tpu as pltpu

LEAKY_SLOPE = 0.01          # nn.LeakyReLU default negative slope
EPS = 1e-6
LANE = 128
SUBLANE = 8


def _leaky_relu(x):
    return jnp.where(x > 0, x, LEAKY_SLOPE * x)


def _round_up(a, m):
    return ((a + m - 1) // m) * m


def covblock_kernel(xf_ref, c_ref, p_ref, w1_ref, b1_ref, w2_ref, b2_ref,
                    w3_ref, b3_ref, o_ref, s_acc):
    """Grid = (B // Bt, Nf // Nt_f).
    Axis 0 ("parallel"): batch tiles.  Axis 1 ("arbitrary"): reduction over
    folded-sample tiles, accumulating per-lane sums of squares in VMEM.

      xf_ref : (Bt, Nt_f, L)   lane-dense fold, L = fold * F (128 when F | 128)
      c_ref  : (L, L)          blockdiag(I_F - J_F/F) -> per-sample centering
      p_ref  : (L, F)          0/1 collapse map: lane l -> feature l % F
      s_acc  : (Bt, 8, L)      per-sublane partial sums (collapsed in finalize)
    """
    nk = pl.program_id(1)
    Bt, Nt_f, L = xf_ref.shape

    @pl.when(nk == 0)
    def _init():
        s_acc[...] = jnp.zeros_like(s_acc)

    # Hot path: one MXU matmul (centering), one VPU multiply, plain vadds.
    x = xf_ref[...].reshape(Bt * Nt_f, L)                      # layout-free
    xm = jnp.dot(x, c_ref[...], preferred_element_type=jnp.float32)
    xm2 = (xm * xm).reshape(Bt, Nt_f // SUBLANE, SUBLANE, L)
    s_acc[...] += jnp.sum(xm2, axis=1)                         # VALU-only adds

    @pl.when(nk == pl.num_programs(1) - 1)
    def _finalize():
        # Collapse the sublane rows, then the `fold` feature copies -> s[b, f].
        s_lane = jnp.sum(s_acc[...], axis=1)                   # (Bt, L)
        s = jnp.dot(s_lane, p_ref[...], preferred_element_type=jnp.float32)
        # diag(cov / (outer + eps)) == s / (s + eps)  (exact algebraic identity:
        # both diag(xm^T xm) and diag(norm^T norm) equal sum_n xm^2).
        diag = s / (s + EPS)
        # cov_mlp: Linear -> Dropout(eval: identity) -> LeakyReLU ->
        #          Linear -> LeakyReLU -> Linear
        h = jnp.dot(diag, w1_ref[...], preferred_element_type=jnp.float32)
        h = _leaky_relu(h + b1_ref[...])
        h = jnp.dot(h, w2_ref[...], preferred_element_type=jnp.float32)
        h = _leaky_relu(h + b2_ref[...])
        y = jnp.dot(h, w3_ref[...], preferred_element_type=jnp.float32)
        # TODO(synk): for very large B, fold 8 batch rows into a 128-lane output
        # slab to avoid masked (vst.msk) partial stores; negligible at B=16.
        o_ref[...] = (y + b3_ref[...]).astype(o_ref.dtype)


def _padded_bytes(shape, itemsize=4):
    """Physical VMEM footprint: second-minor dim pads to 8, minor pads to 128."""
    shape = tuple(int(d) for d in shape)
    if len(shape) == 1:
        shape = (1,) + shape
    lead = 1
    for d in shape[:-2]:
        lead *= d
    return lead * _round_up(shape[-2], SUBLANE) * _round_up(shape[-1], LANE) * itemsize


def _largest_divisor(total, candidates):
    for c in candidates:
        if c <= total and total % c == 0:
            return c
    return total


def covblock_forward(x, params):
    """x: (B, N, F) float32, N = H*W samples, F = feature_dimension (band).
    Returns (B, features_num), matching CovBlock.forward in eval mode."""
    w1, b1, w2, b2, w3, b3 = params
    B, N, F = x.shape
    H = w2.shape[1]
    O = w3.shape[1]

    # --- lane-dense fold: (B, N, F) -> (B, N/fold, fold*F), fold*F == 128 when
    # F divides 128.  The reshape is contiguous (free); zero-padded samples are
    # exact no-ops after centering, so padding the sample axis is exact.
    fold = LANE // F if (F <= LANE and LANE % F == 0) else 1
    L = fold * F

    # --- batch tile: multiple of 8 when possible; cap at B//2 (B >= 16) so the
    # "parallel" batch axis has >= 2 steps for the two v7x TensorCores.
    bt_cap = B // 2 if B >= 2 * SUBLANE else B
    Bt = _largest_divisor(B, tuple(c for c in (128, 64, 32, 16, 8) if c <= bt_cap))

    # --- folded-sample tile: budget against the PHYSICAL (lane-padded) block
    # size, max(L, 128) lanes per row (the old F-wide budget under-counted 8x).
    # ~4 MiB per pipeline buffer keeps the 2-deep x pipeline + scratch well
    # under v5e's 16 MiB scoped default and v7x's 64 MiB physical VMEM.
    x_buf_budget = 4 * 1024 * 1024
    row_bytes = Bt * _round_up(L, LANE) * 4
    max_ntf = max(SUBLANE, (x_buf_budget // row_bytes) // SUBLANE * SUBLANE)

    n_rows = -(-N // fold)                        # folded rows needed
    n_rows = _round_up(n_rows, SUBLANE)           # keep blocks / reshapes aligned
    Nt_f = n_rows if n_rows <= max_ntf else max_ntf
    Nf = _round_up(n_rows, Nt_f)                  # rows after tile-exact padding

    N_padded = Nf * fold
    if N_padded != N:
        x = jnp.pad(x, ((0, 0), (0, N_padded - N), (0, 0)))
    xf = x.reshape(B, Nf, L)

    grid = (B // Bt, Nf // Nt_f)

    # --- constant operands: block-diag centering matrix and fold-collapse map.
    cen = np.eye(F, dtype=np.float32) - np.full((F, F), 1.0 / F, np.float32)
    C = np.zeros((L, L), np.float32)
    P = np.zeros((L, F), np.float32)
    for k in range(fold):
        C[k * F:(k + 1) * F, k * F:(k + 1) * F] = cen
        P[k * F:(k + 1) * F, :] = np.eye(F, dtype=np.float32)
    C = jnp.asarray(C)
    P = jnp.asarray(P)

    # --- explicit scoped-VMEM limit from the padded, double-buffered totals.
    weight_bytes = sum(_padded_bytes(a.shape) for a in (C, P, w1, b1, w2, b2, w3, b3))
    vmem_need = (2 * _padded_bytes((Bt, Nt_f, L))        # x, double-buffered
                 + _padded_bytes((Bt, SUBLANE, L))       # s_acc scratch
                 + 2 * _padded_bytes((Bt, O))            # output, double-buffered
                 + 2 * weight_bytes)                     # conservative x2
    vmem_limit = int(min(max(2 * vmem_need, 16 * 1024 * 1024), 48 * 1024 * 1024))

    flops = (2 * B * Nf * L * L                          # centering matmuls
             + 3 * B * Nf * L                            # square + accumulate
             + 2 * B * (L * F + F * F + F * H + H * O))  # collapse + MLP
    bytes_accessed = 4 * (B * Nf * L + C.size + P.size + w1.size + b1.size
                          + w2.size + b2.size + w3.size + b3.size + B * O)
    cost = pl.CostEstimate(flops=int(flops), transcendentals=int(B * F),
                           bytes_accessed=int(bytes_accessed))

    def full(shape):
        return pl.BlockSpec(shape, lambda b, n: (0,) * len(shape))

    return pl.pallas_call(
        covblock_kernel,
        out_shape=jax.ShapeDtypeStruct((B, O), jnp.float32),
        grid=grid,
        in_specs=[
            pl.BlockSpec((Bt, Nt_f, L), lambda b, n: (b, n, 0)),   # x (folded)
            full((L, L)),                                          # centering
            full((L, F)),                                          # fold collapse
            full((F, F)), full((1, F)),                            # w1, b1
            full((F, H)), full((1, H)),                            # w2, b2
            full((H, O)), full((1, O)),                            # w3, b3
        ],
        out_specs=pl.BlockSpec((Bt, O), lambda b, n: (b, 0)),      # resident over n
        scratch_shapes=[pltpu.VMEM((Bt, SUBLANE, L), jnp.float32)],
        compiler_params=pltpu.CompilerParams(
            dimension_semantics=("parallel", "arbitrary"),
            vmem_limit_bytes=vmem_limit),
        cost_estimate=cost,
    )(xf, C, P, w1, b1, w2, b2, w3, b3)


def covblock_reference(x, params):
    """Pure-JAX mirror of the PyTorch CovBlock.forward (eval mode), full cov path."""
    w1, b1, w2, b2, w3, b3 = params
    hi = jax.lax.Precision.HIGHEST
    xm = x - jnp.mean(x, axis=-1, keepdims=True)
    cov = jnp.einsum("bnf,bng->bfg", xm, xm, precision=hi)
    norm = jnp.sqrt(jnp.sum(xm * xm, axis=-2, keepdims=True))     # (B, 1, F)
    outer = jnp.einsum("bif,big->bfg", norm, norm, precision=hi)
    cov = cov / (outer + EPS)
    diag = jnp.diagonal(cov, axis1=-2, axis2=-1)                  # (B, F)
    h = _leaky_relu(jnp.dot(diag, w1, precision=hi) + b1)
    h = _leaky_relu(jnp.dot(h, w2, precision=hi) + b2)
    return jnp.dot(h, w3, precision=hi) + b3


def init_params(key, feature_dimension, features_num, hidden_dim):
    k1, k2, k3, k4, k5, k6 = jax.random.split(key, 6)
    s = 0.1
    w1 = s * jax.random.normal(k1, (feature_dimension, feature_dimension), jnp.float32)
    b1 = s * jax.random.normal(k2, (1, feature_dimension), jnp.float32)
    w2 = s * jax.random.normal(k3, (feature_dimension, hidden_dim), jnp.float32)
    b2 = s * jax.random.normal(k4, (1, hidden_dim), jnp.float32)
    w3 = s * jax.random.normal(k5, (hidden_dim, features_num), jnp.float32)
    b3 = s * jax.random.normal(k6, (1, features_num), jnp.float32)
    return (w1, b1, w2, b2, w3, b3)


if __name__ == "__main__":
    # Mirror the module's usage: CovBlock(band, band, band // 2) applied to
    # rearrange(fmap, 'B C H W -> B (H W) C'): band=16 (F=O=16, H=8),
    # spatial 8x8 -> N=64 samples, batch B=16 so the parallel batch axis has
    # two grid steps (one per v7x TensorCore).
    band = 16
    B, Hs, Ws = 16, 8, 8
    N = Hs * Ws
    F, Hd, O = band, band // 2, band

    key = jax.random.PRNGKey(0)
    kx, kp = jax.random.split(key)
    # Small amplitude so s = sum_n xm^2 is comparable to eps and the
    # s / (s + eps) weighting path is genuinely exercised (as in BandSelectBlock,
    # where the input is pre-scaled by 1 / (H*W - 1)).
    x = 4e-4 * jax.random.normal(kx, (B, N, F), jnp.float32)
    params = init_params(kp, feature_dimension=F, features_num=O, hidden_dim=Hd)

    out = jax.block_until_ready(covblock_forward(x, params))
    ref = covblock_reference(x, params)

    assert out.shape == (B, O), out.shape
    assert jnp.allclose(out, ref, rtol=2e-2, atol=5e-3), (
        float(jnp.max(jnp.abs(out - ref))), out, ref)

    print("KERNEL_OK")
</pallas_src>

<mosaic_0001>
module attributes {stable_mosaic.version = 11 : i64} {
  func.func @covblock_kernel(%arg0: i32, %arg1: i32, %arg2: memref<8x8x128xf32, #tpu.memory_space<vmem>>, %arg3: memref<128x128xf32, #tpu.memory_space<vmem>>, %arg4: memref<128x16xf32, #tpu.memory_space<vmem>>, %arg5: memref<16x16xf32, #tpu.memory_space<vmem>>, %arg6: memref<1x16xf32, #tpu.memory_space<vmem>>, %arg7: memref<16x8xf32, #tpu.memory_space<vmem>>, %arg8: memref<1x8xf32, #tpu.memory_space<vmem>>, %arg9: memref<8x16xf32, #tpu.memory_space<vmem>>, %arg10: memref<1x16xf32, #tpu.memory_space<vmem>>, %arg11: memref<8x16xf32, #tpu.memory_space<vmem>>, %arg12: memref<8x8x128xf32, #tpu.memory_space<vmem>>) attributes {dimension_semantics = [#tpu.dimension_semantics<parallel>, #tpu.dimension_semantics<arbitrary>], iteration_bounds = array<i64: 2, 1>, scalar_prefetch = 0 : i64, scratch_operands = 1 : i64, tpu.core_type = #tpu.core_type<tc>, window_params = [{transform_indices = @transform_0, window_bounds = array<i64: 8, 8, 128>}, {pipeline_mode = #tpu.pipeline_mode<synchronous>, transform_indices = @transform_1, window_bounds = array<i64: 128, 128>}, {pipeline_mode = #tpu.pipeline_mode<synchronous>, transform_indices = @transform_2, window_bounds = array<i64: 128, 16>}, {pipeline_mode = #tpu.pipeline_mode<synchronous>, transform_indices = @transform_3, window_bounds = array<i64: 16, 16>}, {pipeline_mode = #tpu.pipeline_mode<synchronous>, transform_indices = @transform_4, window_bounds = array<i64: 1, 16>}, {pipeline_mode = #tpu.pipeline_mode<synchronous>, transform_indices = @transform_5, window_bounds = array<i64: 16, 8>}, {pipeline_mode = #tpu.pipeline_mode<synchronous>, transform_indices = @transform_6, window_bounds = array<i64: 1, 8>}, {pipeline_mode = #tpu.pipeline_mode<synchronous>, transform_indices = @transform_7, window_bounds = array<i64: 8, 16>}, {pipeline_mode = #tpu.pipeline_mode<synchronous>, transform_indices = @transform_8, window_bounds = array<i64: 1, 16>}, {transform_indices = @transform_9, window_bounds = array<i64: 8, 16>}]} {
    %c0_i32 = arith.constant 0 : i32
    %0 = arith.cmpi eq, %arg1, %c0_i32 : i32
    %1 = arith.extui %0 : i1 to i32
    %c0_i32_0 = arith.constant 0 : i32
    %2 = arith.cmpi ne, %1, %c0_i32_0 : i32
    scf.if %2 {
      %cst_14 = arith.constant 0.000000e+00 : f32
      %16 = vector.broadcast %cst_14 : f32 to vector<8x8x128xf32>
      %c0_15 = arith.constant 0 : index
      %c0_16 = arith.constant 0 : index
      %c0_17 = arith.constant 0 : index
      %17 = vector.load %arg12[%c0_15, %c0_16, %c0_17] : memref<8x8x128xf32, #tpu.memory_space<vmem>>, vector<8x8x128xf32>
      tpu.vector_store %arg12[%c0_15, %c0_16, %c0_17], %16 {strides = array<i32>} : memref<8x8x128xf32, #tpu.memory_space<vmem>>, vector<8x8x128xf32>,
    } else {
    }
    %c0 = arith.constant 0 : index
    %c0_1 = arith.constant 0 : index
    %c0_2 = arith.constant 0 : index
    %3 = vector.load %arg2[%c0, %c0_1, %c0_2] : memref<8x8x128xf32, #tpu.memory_space<vmem>>, vector<8x8x128xf32>
    %4 = vector.shape_cast %3 : vector<8x8x128xf32> to vector<64x128xf32>
    %c0_3 = arith.constant 0 : index
    %c0_4 = arith.constant 0 : index
    %5 = vector.load %arg3[%c0_3, %c0_4] : memref<128x128xf32, #tpu.memory_space<vmem>>, vector<128x128xf32>
    %cst = arith.constant dense<0.000000e+00> : vector<64x128xf32>
    %6 = tpu.matmul %4, %5, %cst {dimension_numbers = #tpu.dot_dimension_numbers<[1], [0], [0], [1], [0, 0, 1, 1], [], []>} : vector<64x128xf32>, vector<128x128xf32>, vector<64x128xf32> -> vector<64x128xf32>
    %7 = arith.mulf %6, %6 : vector<64x128xf32>
    %8 = vector.shape_cast %7 : vector<64x128xf32> to vector<8x1x8x128xf32>
    %c0_5 = arith.constant 0 : index
    %c0_6 = arith.constant 0 : index
    %c0_7 = arith.constant 0 : index
    %9 = vector.load %arg12[%c0_5, %c0_6, %c0_7] : memref<8x8x128xf32, #tpu.memory_space<vmem>>, vector<8x8x128xf32>
    %cst_8 = arith.constant dense<0.000000e+00> : vector<8x8x128xf32>
    %10 = vector.multi_reduction <add>, %8, %cst_8 [1] : vector<8x1x8x128xf32> to vector<8x8x128xf32>
    %11 = arith.addf %9, %10 : vector<8x8x128xf32>
    %c0_9 = arith.constant 0 : index
    %c0_10 = arith.constant 0 : index
    %c0_11 = arith.constant 0 : index
    %12 = vector.load %arg12[%c0_9, %c0_10, %c0_11] : memref<8x8x128xf32, #tpu.memory_space<vmem>>, vector<8x8x128xf32>
    tpu.vector_store %arg12[%c0_9, %c0_10, %c0_11], %11 {strides = array<i32>} : memref<8x8x128xf32, #tpu.memory_space<vmem>>, vector<8x8x128xf32>,
    %c0_i32_12 = arith.constant 0 : i32
    %13 = arith.cmpi eq, %arg1, %c0_i32_12 : i32
    %14 = arith.extui %13 : i1 to i32
    %c0_i32_13 = arith.constant 0 : i32
    %15 = arith.cmpi ne, %14, %c0_i32_13 : i32
    scf.if %15 {
      %c0_14 = arith.constant 0 : index
      %c0_15 = arith.constant 0 : index
      %c0_16 = arith.constant 0 : index
      %16 = vector.load %arg12[%c0_14, %c0_15, %c0_16] : memref<8x8x128xf32, #tpu.memory_space<vmem>>, vector<8x8x128xf32>
      %cst_17 = arith.constant dense<0.000000e+00> : vector<8x128xf32>
      %17 = vector.multi_reduction <add>, %16, %cst_17 [1] : vector<8x8x128xf32> to vector<8x128xf32>
      %c0_18 = arith.constant 0 : index
      %c0_19 = arith.constant 0 : index
      %18 = vector.load %arg4[%c0_18, %c0_19] : memref<128x16xf32, #tpu.memory_space<vmem>>, vector<128x16xf32>
      %cst_20 = arith.constant dense<0.000000e+00> : vector<8x16xf32>
      %19 = tpu.matmul %17, %18, %cst_20 {dimension_numbers = #tpu.dot_dimension_numbers<[1], [0], [0], [1], [0, 0, 1, 1], [], []>} : vector<8x128xf32>, vector<128x16xf32>, vector<8x16xf32> -> vector<8x16xf32>
      %cst_21 = arith.constant 9.99999997E-7 : f32
      %20 = vector.broadcast %cst_21 : f32 to vector<8x16xf32>
      %21 = arith.addf %19, %20 : vector<8x16xf32>
      %22 = arith.divf %19, %21 : vector<8x16xf32>
      %c0_22 = arith.constant 0 : index
      %c0_23 = arith.constant 0 : index
      %23 = vector.load %arg5[%c0_22, %c0_23] : memref<16x16xf32, #tpu.memory_space<vmem>>, vector<16x16xf32>
      %cst_24 = arith.constant dense<0.000000e+00> : vector<8x16xf32>
      %24 = tpu.matmul %22, %23, %cst_24 {dimension_numbers = #tpu.dot_dimension_numbers<[1], [0], [0], [1], [0, 0, 1, 1], [], []>} : vector<8x16xf32>, vector<16x16xf32>, vector<8x16xf32> -> vector<8x16xf32>
      %c0_25 = arith.constant 0 : index
      %c0_26 = arith.constant 0 : index
      %25 = vector.load %arg6[%c0_25, %c0_26] : memref<1x16xf32, #tpu.memory_space<vmem>>, vector<1x16xf32>
      %26 = vector.broadcast %25 : vector<1x16xf32> to vector<8x16xf32>
      %27 = arith.addf %24, %26 : vector<8x16xf32>
      %cst_27 = arith.constant 0.000000e+00 : f32
      %28 = vector.broadcast %cst_27 : f32 to vector<8x16xf32>
      %29 = arith.cmpf ogt, %27, %28 : vector<8x16xf32>
      %cst_28 = arith.constant 0.00999999977 : f32
      %30 = vector.broadcast %cst_28 : f32 to vector<8x16xf32>
      %31 = arith.mulf %30, %27 : vector<8x16xf32>
      %32 = arith.select %29, %27, %31 : vector<8x16xi1>, vector<8x16xf32>
      %c0_29 = arith.constant 0 : index
      %c0_30 = arith.constant 0 : index
      %33 = vector.load %arg7[%c0_29, %c0_30] : memref<16x8xf32, #tpu.memory_space<vmem>>, vector<16x8xf32>
      %cst_31 = arith.constant dense<0.000000e+00> : vector<8x8xf32>
      %34 = tpu.matmul %32, %33, %cst_31 {dimension_numbers = #tpu.dot_dimension_numbers<[1], [0], [0], [1], [0, 0, 1, 1], [], []>} : vector<8x16xf32>, vector<16x8xf32>, vector<8x8xf32> -> vector<8x8xf32>
      %c0_32 = arith.constant 0 : index
      %c0_33 = arith.constant 0 : index
      %35 = vector.load %arg8[%c0_32, %c0_33] : memref<1x8xf32, #tpu.memory_space<vmem>>, vector<1x8xf32>
      %36 = vector.broadcast %35 : vector<1x8xf32> to vector<8x8xf32>
      %37 = arith.addf %34, %36 : vector<8x8xf32>
      %cst_34 = arith.constant 0.000000e+00 : f32
      %38 = vector.broadcast %cst_34 : f32 to vector<8x8xf32>
      %39 = arith.cmpf ogt, %37, %38 : vector<8x8xf32>
      %cst_35 = arith.constant 0.00999999977 : f32
      %40 = vector.broadcast %cst_35 : f32 to vector<8x8xf32>
      %41 = arith.mulf %40, %37 : vector<8x8xf32>
      %42 = arith.select %39, %37, %41 : vector<8x8xi1>, vector<8x8xf32>
      %c0_36 = arith.constant 0 : index
      %c0_37 = arith.constant 0 : index
      %43 = vector.load %arg9[%c0_36, %c0_37] : memref<8x16xf32, #tpu.memory_space<vmem>>, vector<8x16xf32>
      %cst_38 = arith.constant dense<0.000000e+00> : vector<8x16xf32>
      %44 = tpu.matmul %42, %43, %cst_38 {dimension_numbers = #tpu.dot_dimension_numbers<[1], [0], [0], [1], [0, 0, 1, 1], [], []>} : vector<8x8xf32>, vector<8x16xf32>, vector<8x16xf32> -> vector<8x16xf32>
      %c0_39 = arith.constant 0 : index
      %c0_40 = arith.constant 0 : index
      %45 = vector.load %arg10[%c0_39, %c0_40] : memref<1x16xf32, #tpu.memory_space<vmem>>, vector<1x16xf32>
      %46 = vector.broadcast %45 : vector<1x16xf32> to vector<8x16xf32>
      %47 = arith.addf %44, %46 : vector<8x16xf32>
      %c0_41 = arith.constant 0 : index
      %c0_42 = arith.constant 0 : index
      %48 = vector.load %arg11[%c0_41, %c0_42] : memref<8x16xf32, #tpu.memory_space<vmem>>, vector<8x16xf32>
      tpu.vector_store %arg11[%c0_41, %c0_42], %47 {strides = array<i32>} : memref<8x16xf32, #tpu.memory_space<vmem>>, vector<8x16xf32>,
    } else {
    }
    return
  }
  func.func @transform_0(%arg0: i32, %arg1: i32) -> (i32, i32, i32) {
    %c0_i32 = arith.constant 0 : i32
    %c0_i32_0 = arith.constant 0 : i32
    return %arg0, %arg1, %c0_i32 : i32, i32, i32
  }
  func.func @transform_1(%arg0: i32, %arg1: i32) -> (i32, i32) {
    %c0_i32 = arith.constant 0 : i32
    %c0_i32_0 = arith.constant 0 : i32
    %c0_i32_1 = arith.constant 0 : i32
    return %c0_i32, %c0_i32_0 : i32, i32
  }
  func.func @transform_2(%arg0: i32, %arg1: i32) -> (i32, i32) {
    %c0_i32 = arith.constant 0 : i32
    %c0_i32_0 = arith.constant 0 : i32
    %c0_i32_1 = arith.constant 0 : i32
    return %c0_i32, %c0_i32_0 : i32, i32
  }
  func.func @transform_3(%arg0: i32, %arg1: i32) -> (i32, i32) {
    %c0_i32 = arith.constant 0 : i32
    %c0_i32_0 = arith.constant 0 : i32
    %c0_i32_1 = arith.constant 0 : i32
    return %c0_i32, %c0_i32_0 : i32, i32
  }
  func.func @transform_4(%arg0: i32, %arg1: i32) -> (i32, i32) {
    %c0_i32 = arith.constant 0 : i32
    %c0_i32_0 = arith.constant 0 : i32
    %c0_i32_1 = arith.constant 0 : i32
    return %c0_i32, %c0_i32_0 : i32, i32
  }
  func.func @transform_5(%arg0: i32, %arg1: i32) -> (i32, i32) {
    %c0_i32 = arith.constant 0 : i32
    %c0_i32_0 = arith.constant 0 : i32
    %c0_i32_1 = arith.constant 0 : i32
    return %c0_i32, %c0_i32_0 : i32, i32
  }
  func.func @transform_6(%arg0: i32, %arg1: i32) -> (i32, i32) {
    %c0_i32 = arith.constant 0 : i32
    %c0_i32_0 = arith.constant 0 : i32
    %c0_i32_1 = arith.constant 0 : i32
    return %c0_i32, %c0_i32_0 : i32, i32
  }
  func.func @transform_7(%arg0: i32, %arg1: i32) -> (i32, i32) {
    %c0_i32 = arith.constant 0 : i32
    %c0_i32_0 = arith.constant 0 : i32
    %c0_i32_1 = arith.constant 0 : i32
    return %c0_i32, %c0_i32_0 : i32, i32
  }
  func.func @transform_8(%arg0: i32, %arg1: i32) -> (i32, i32) {
    %c0_i32 = arith.constant 0 : i32
    %c0_i32_0 = arith.constant 0 : i32
    %c0_i32_1 = arith.constant 0 : i32
    return %c0_i32, %c0_i32_0 : i32, i32
  }
  func.func @transform_9(%arg0: i32, %arg1: i32) -> (i32, i32) {
    %c0_i32 = arith.constant 0 : i32
    %c0_i32_0 = arith.constant 0 : i32
    return %arg0, %c0_i32 : i32, i32
  }
}

</mosaic_0001>

<llo_original>
// kernel: tpu_custom_call.1
$region0: #{tpu_custom_call.1}
  #allocation0 [shape = 'u32[]', space=smem, size = 0x4, offset = 0x4, fixed_abs, tag = 'smem constant byte address 0x4 - core index']
  #allocation1 [shape = 'u32[144,128]{1,0:T(1,128)}', space=vmem, size = 0x12000, scoped, tag = 'internal scratch']
  #allocation2 [shape = 'f32[8,8,128]{2,1,0:T(8,128)}', space=vmem, size = 0x8000, scoped, tag = 'scratch operand']
  %s0 = inlined_call_operand.vmem [shape: f32[16,8,128], index: 0, kind: input, shape index: {}]
  %s1 = inlined_call_operand.hbm [shape: f32[128,128], index: 1, kind: input, shape index: {}]
  %s2 = inlined_call_operand.vmem [shape: f32[128,16], index: 2, kind: input, shape index: {}]
  %s3 = inlined_call_operand.vmem [shape: f32[16,16], index: 3, kind: input, shape index: {}]
  %s4 = inlined_call_operand.vmem [shape: f32[1,16], index: 4, kind: input, shape index: {}]
  %s5 = inlined_call_operand.vmem [shape: f32[16,8], index: 5, kind: input, shape index: {}]
  %s6 = inlined_call_operand.vmem [shape: f32[1,8], index: 6, kind: input, shape index: {}]
  %s7 = inlined_call_operand.vmem [shape: f32[8,16], index: 7, kind: input, shape index: {}]
  %s8 = inlined_call_operand.vmem [shape: f32[1,16], index: 8, kind: input, shape index: {}]
  %s9 = inlined_call_operand.hbm [shape: f32[16,16], index: 9, kind: output, shape index: {}]
  %s10 = sld [smem:[#allocation0]]
  $region81: #{tpu_custom_call.1} parent=0
    _
  %s12 = ssub.s32 1, %s10
  %s13 = scalar_select 0, %s12, %s10
  $region1: #{tpu_custom_call.1} parent=0
    #allocation3 [shape = 'u8[65536]{0}', space=vmem, size = 0x10000, scoped, tag = 'input window, operand 1, single buffered']
    #allocation4 [shape = 's32[2]{0}', space=sflag, size = 0x8, scoped, tag = 'scoped memory for tpu_custom_call.1']
    #allocation5 [shape = 's32[2]{0}', space=sflag, size = 0x8, scoped, tag = 'scoped memory for tpu_custom_call.1']
    #allocation6 [shape = 'u8[8192]{0}', space=vmem, size = 0x2000, scoped, tag = 'output window, operand 0']
    %14 = vsyncpa [#allocation4], 0
    %15 = vsyncpa [#allocation5], 0
    %s16 = scalar_lea.sflag [#allocation5], 1
    %17 = vsyncpa %s16, 0
    loop: start=0, step=1, limit=4
    $region2: #{tpu_custom_call.1} parent=1 // loop_pre_header
      _
    $region3: #{tpu_custom_call.1} parent=1 // loop_header
      %s19 = sphi 0, %s23
      %p20 = scmp.ge.s32.totalorder %s19, 4
      %s26 = sphi 0, %s38
      %s27 = sphi 0, %s34
      %s28 = sphi 0, %s26
      %s29 = sphi 0, %s27
      %s30 = sphi 0, %s28
      %s31 = sphi 0, %s29
      %s43 = sphi 0, %s45
      %s46 = sphi 0, %s43
      %s47 = sphi 0, %s46
      %s63 = sphi 0, %s47
      %s67 = sphi 0, %s67
      %s69 = sphi 0, %s67
      %s70 = sphi 0, %s69
      %s84 = sphi 0, %s70
      %s88 = sphi 0, %s88
      %s90 = sphi 0, %s88
      %s91 = sphi 0, %s90
      %s105 = sphi 0, %s91
      %s109 = sphi 0, %s109
      %s111 = sphi 0, %s109
      %s112 = sphi 0, %s111
      %s126 = sphi 0, %s112
      %s130 = sphi 0, %s130
      %s132 = sphi 0, %s130
      %s133 = sphi 0, %s132
      %s147 = sphi 0, %s133
      %s151 = sphi 0, %s151
      %s153 = sphi 0, %s151
      %s154 = sphi 0, %s153
      %s168 = sphi 0, %s154
      %s172 = sphi 0, %s172
      %s174 = sphi 0, %s172
      %s175 = sphi 0, %s174
      %s189 = sphi 0, %s175
      %s193 = sphi 0, %s193
      %s195 = sphi 0, %s193
      %s196 = sphi 0, %s195
      %s210 = sphi 0, %s196
      %s214 = sphi 0, %s214
      %s216 = sphi 0, %s214
      %s217 = sphi 0, %s216
      %s231 = sphi 0, %s217
      %s237 = sphi 0, %s239
      %s240 = sphi 0, %s237
      %s241 = sphi 0, %s240
      %s257 = sphi 0, %s241
    $region4: #{tpu_custom_call.1} parent=1 // loop_header_branch
      %22 = sbr.rel (%p20) target = $region8
    $region5: #{tpu_custom_call.1} parent=1 // loop_body
      %s24 = ssub.s32 %s19, 1
      %s25 = ssub.s32 %s19, 2
      %s32 = sadd.s32 1, %s27
      %p33 = scmp.ge.s32.totalorder %s32, 1
      %s34 = scalar_select %p33, 0, %s32
      %s35 = sadd.s32 1, %s26
      %s36 = scalar_select %p33, %s35, %s26
      %p37 = scmp.ge.s32.totalorder %s36, 2
      %s38 = scalar_select %p37, 0, %s36
      %s39 = ssub.s32 %s26, %s38
      %s40 = ssub.s32 %s27, %s34
      %s41 = sor.u32 %s39, %s40
      %p42 = scmp.eq.s32.totalorder %s41, 0
      %s44 = sadd.s32 %s43, 1
      %s45 = scalar_select %p42, %s43, %s44
      %p48 = pneg %p42
      %p49 = scmp.eq.s32.totalorder %s19, 1
      %p50 = por %p48, %p49
      %p51 = scmp.ne.s32.totalorder %s43, %s46
      %p52 = scmp.eq.s32.totalorder %s19, 0
      %p53 = por %p51, %p52
      %p54 = scmp.ne.s32.totalorder %s43, %s46
      %p55 = scmp.eq.s32.totalorder %s24, 1
      %p56 = por %p54, %p55
      %p57 = scmp.ne.s32.totalorder %s46, %s47
      %p58 = scmp.eq.s32.totalorder %s24, 0
      %p59 = por %p57, %p58
      %p60 = scmp.ne.s32.totalorder %s46, %s47
      %p61 = scmp.eq.s32.totalorder %s25, 1
      %p62 = por %p60, %p61
      %p64 = scmp.ne.s32.totalorder %s47, %s63
      %p65 = scmp.eq.s32.totalorder %s25, 0
      %p66 = por %p64, %p65
      %s68 = sadd.s32 %s67, 1
      %p71 = scmp.eq.s32.totalorder %s19, 1
      %p72 = scmp.ne.s32.totalorder %s67, %s69
      %p73 = scmp.eq.s32.totalorder %s19, 0
      %p74 = por %p72, %p73
      %p75 = scmp.ne.s32.totalorder %s67, %s69
      %p76 = scmp.eq.s32.totalorder %s24, 1
      %p77 = por %p75, %p76
      %p78 = scmp.ne.s32.totalorder %s69, %s70
      %p79 = scmp.eq.s32.totalorder %s24, 0
      %p80 = por %p78, %p79
      %p81 = scmp.ne.s32.totalorder %s69, %s70
      %p82 = scmp.eq.s32.totalorder %s25, 1
      %p83 = por %p81, %p82
      %p85 = scmp.ne.s32.totalorder %s70, %s84
      %p86 = scmp.eq.s32.totalorder %s25, 0
      %p87 = por %p85, %p86
      %s89 = sadd.s32 %s88, 1
      %p92 = scmp.eq.s32.totalorder %s19, 1
      %p93 = scmp.ne.s32.totalorder %s88, %s90
      %p94 = scmp.eq.s32.totalorder %s19, 0
      %p95 = por %p93, %p94
      %p96 = scmp.ne.s32.totalorder %s88, %s90
      %p97 = scmp.eq.s32.totalorder %s24, 1
      %p98 = por %p96, %p97
      %p99 = scmp.ne.s32.totalorder %s90, %s91
      %p100 = scmp.eq.s32.totalorder %s24, 0
      %p101 = por %p99, %p100
      %p102 = scmp.ne.s32.totalorder %s90, %s91
      %p103 = scmp.eq.s32.totalorder %s25, 1
      %p104 = por %p102, %p103
      %p106 = scmp.ne.s32.totalorder %s91, %s105
      %p107 = scmp.eq.s32.totalorder %s25, 0
      %p108 = por %p106, %p107
      %s110 = sadd.s32 %s109, 1
      %p113 = scmp.eq.s32.totalorder %s19, 1
      %p114 = scmp.ne.s32.totalorder %s109, %s111
      %p115 = scmp.eq.s32.totalorder %s19, 0
      %p116 = por %p114, %p115
      %p117 = scmp.ne.s32.totalorder %s109, %s111
      %p118 = scmp.eq.s32.totalorder %s24, 1
      %p119 = por %p117, %p118
      %p120 = scmp.ne.s32.totalorder %s111, %s112
      %p121 = scmp.eq.s32.totalorder %s24, 0
      %p122 = por %p120, %p121
      %p123 = scmp.ne.s32.totalorder %s111, %s112
      %p124 = scmp.eq.s32.totalorder %s25, 1
      %p125 = por %p123, %p124
      %p127 = scmp.ne.s32.totalorder %s112, %s126
      %p128 = scmp.eq.s32.totalorder %s25, 0
      %p129 = por %p127, %p128
      %s131 = sadd.s32 %s130, 1
      %p134 = scmp.eq.s32.totalorder %s19, 1
      %p135 = scmp.ne.s32.totalorder %s130, %s132
      %p136 = scmp.eq.s32.totalorder %s19, 0
      %p137 = por %p135, %p136
      %p138 = scmp.ne.s32.totalorder %s130, %s132
      %p139 = scmp.eq.s32.totalorder %s24, 1
      %p140 = por %p138, %p139
      %p141 = scmp.ne.s32.totalorder %s132, %s133
      %p142 = scmp.eq.s32.totalorder %s24, 0
      %p143 = por %p141, %p142
      %p144 = scmp.ne.s32.totalorder %s132, %s133
      %p145 = scmp.eq.s32.totalorder %s25, 1
      %p146 = por %p144, %p145
      %p148 = scmp.ne.s32.totalorder %s133, %s147
      %p149 = scmp.eq.s32.totalorder %s25, 0
      %p150 = por %p148, %p149
      %s152 = sadd.s32 %s151, 1
      %p155 = scmp.eq.s32.totalorder %s19, 1
      %p156 = scmp.ne.s32.totalorder %s151, %s153
      %p157 = scmp.eq.s32.totalorder %s19, 0
      %p158 = por %p156, %p157
      %p159 = scmp.ne.s32.totalorder %s151, %s153
      %p160 = scmp.eq.s32.totalorder %s24, 1
      %p161 = por %p159, %p160
      %p162 = scmp.ne.s32.totalorder %s153, %s154
      %p163 = scmp.eq.s32.totalorder %s24, 0
      %p164 = por %p162, %p163
      %p165 = scmp.ne.s32.totalorder %s153, %s154
      %p166 = scmp.eq.s32.totalorder %s25, 1
      %p167 = por %p165, %p166
      %p169 = scmp.ne.s32.totalorder %s154, %s168
      %p170 = scmp.eq.s32.totalorder %s25, 0
      %p171 = por %p169, %p170
      %s173 = sadd.s32 %s172, 1
      %p176 = scmp.eq.s32.totalorder %s19, 1
      %p177 = scmp.ne.s32.totalorder %s172, %s174
      %p178 = scmp.eq.s32.totalorder %s19, 0
      %p179 = por %p177, %p178
      %p180 = scmp.ne.s32.totalorder %s172, %s174
      %p181 = scmp.eq.s32.totalorder %s24, 1
      %p182 = por %p180, %p181
      %p183 = scmp.ne.s32.totalorder %s174, %s175
      %p184 = scmp.eq.s32.totalorder %s24, 0
      %p185 = por %p183, %p184
      %p186 = scmp.ne.s32.totalorder %s174, %s175
      %p187 = scmp.eq.s32.totalorder %s25, 1
      %p188 = por %p186, %p187
      %p190 = scmp.ne.s32.totalorder %s175, %s189
      %p191 = scmp.eq.s32.totalorder %s25, 0
      %p192 = por %p190, %p191
      %s194 = sadd.s32 %s193, 1
      %p197 = scmp.eq.s32.totalorder %s19, 1
      %p198 = scmp.ne.s32.totalorder %s193, %s195
      %p199 = scmp.eq.s32.totalorder %s19, 0
      %p200 = por %p198, %p199
      %p201 = scmp.ne.s32.totalorder %s193, %s195
      %p202 = scmp.eq.s32.totalorder %s24, 1
      %p203 = por %p201, %p202
      %p204 = scmp.ne.s32.totalorder %s195, %s196
      %p205 = scmp.eq.s32.totalorder %s24, 0
      %p206 = por %p204, %p205
      %p207 = scmp.ne.s32.totalorder %s195, %s196
      %p208 = scmp.eq.s32.totalorder %s25, 1
      %p209 = por %p207, %p208
      %p211 = scmp.ne.s32.totalorder %s196, %s210
      %p212 = scmp.eq.s32.totalorder %s25, 0
      %p213 = por %p211, %p212
      %s215 = sadd.s32 %s214, 1
      %p218 = scmp.eq.s32.totalorder %s19, 1
      %p219 = scmp.ne.s32.totalorder %s214, %s216
      %p220 = scmp.eq.s32.totalorder %s19, 0
      %p221 = por %p219, %p220
      %p222 = scmp.ne.s32.totalorder %s214, %s216
      %p223 = scmp.eq.s32.totalorder %s24, 1
      %p224 = por %p222, %p223
      %p225 = scmp.ne.s32.totalorder %s216, %s217
      %p226 = scmp.eq.s32.totalorder %s24, 0
      %p227 = por %p225, %p226
      %p228 = scmp.ne.s32.totalorder %s216, %s217
      %p229 = scmp.eq.s32.totalorder %s25, 1
      %p230 = por %p228, %p229
      %p232 = scmp.ne.s32.totalorder %s217, %s231
      %p233 = scmp.eq.s32.totalorder %s25, 0
      %p234 = por %p232, %p233
      %s235 = ssub.s32 %s26, %s38
      %p236 = scmp.eq.s32.totalorder %s235, 0
      %s238 = sadd.s32 %s237, 1
      %s239 = scalar_select %p236, %s237, %s238
      %p242 = pneg %p236
      %p243 = scmp.eq.s32.totalorder %s19, 1
      %p244 = por %p242, %p243
      %p245 = scmp.ne.s32.totalorder %s237, %s240
      %p246 = scmp.eq.s32.totalorder %s19, 0
      %p247 = por %p245, %p246
      %p248 = scmp.ne.s32.totalorder %s237, %s240
      %p249 = scmp.eq.s32.totalorder %s24, 1
      %p250 = por %p248, %p249
      %p251 = scmp.ne.s32.totalorder %s240, %s241
      %p252 = scmp.eq.s32.totalorder %s24, 0
      %p253 = por %p251, %p252
      %p254 = scmp.ne.s32.totalorder %s240, %s241
      %p255 = scmp.eq.s32.totalorder %s25, 1
      %p256 = por %p254, %p255
      %p258 = scmp.ne.s32.totalorder %s241, %s257
      %p259 = scmp.eq.s32.totalorder %s25, 0
      %p260 = por %p258, %p259
      %p261 = scmp.le.s32.totalorder 1, %s19
      %p262 = scmp.lt.s32.totalorder %s19, 3
      %p263 = pnand %p261, %p262
      %p264 = pneg %p263
      // Predicated region
      $region9: #{tpu_custom_call.1} parent=5 // pred_check
        _
      $region10: #{tpu_custom_call.1} parent=5 // pred_check_branch
        %266 = sbr.rel (%p263) target = $region12
      $region11: #{tpu_custom_call.1} parent=5 // pred_region
        %s267 = ssub.s32 %s19, 1
        // Predicated region
        $region13: #{tpu_custom_call.1} parent=11 // pred_check
          %p268 = pneg %p80
        $region14: #{tpu_custom_call.1} parent=11 // pred_check_branch
          %270 = sbr.rel (%p268) target = $region16
        $region15: #{tpu_custom_call.1} parent=11 // pred_region
          %s272 = ssub.s32 2048, 2048
          %273 = vsyncadd [#allocation4], %s272
          %s274 = sshll.u32 [#allocation3], 4
          %s275 = int_to_ptr.vmem [resolvable:$true] %s274
          %280 = dma.hbm_to_vmem [thread:$0]  %s1, 2048, %s275, [#allocation4], 128, 128, 8
        $region16: #{tpu_custom_call.1} parent=11 // pred_fallthru
          _
        // Predicated region
        $region17: #{tpu_custom_call.1} parent=11 // pred_check
          %p281 = pneg %p101
        $region18: #{tpu_custom_call.1} parent=11 // pred_check_branch
          %283 = sbr.rel (%p281) target = $region20
        $region19: #{tpu_custom_call.1} parent=11 // pred_region
          _
        $region20: #{tpu_custom_call.1} parent=11 // pred_fallthru
          _
        // Predicated region
        $region21: #{tpu_custom_call.1} parent=11 // pred_check
          %p284 = pneg %p122
        $region22: #{tpu_custom_call.1} parent=11 // pred_check_branch
          %286 = sbr.rel (%p284) target = $region24
        $region23: #{tpu_custom_call.1} parent=11 // pred_region
          _
        $region24: #{tpu_custom_call.1} parent=11 // pred_fallthru
          _
        // Predicated region
        $region25: #{tpu_custom_call.1} parent=11 // pred_check
          %p287 = pneg %p143
        $region26: #{tpu_custom_call.1} parent=11 // pred_check_branch
          %289 = sbr.rel (%p287) target = $region28
        $region27: #{tpu_custom_call.1} parent=11 // pred_region
          _
        $region28: #{tpu_custom_call.1} parent=11 // pred_fallthru
          _
        // Predicated region
        $region29: #{tpu_custom_call.1} parent=11 // pred_check
          %p290 = pneg %p164
        $region30: #{tpu_custom_call.1} parent=11 // pred_check_branch
          %292 = sbr.rel (%p290) target = $region32
        $region31: #{tpu_custom_call.1} parent=11 // pred_region
          _
        $region32: #{tpu_custom_call.1} parent=11 // pred_fallthru
          _
        // Predicated region
        $region33: #{tpu_custom_call.1} parent=11 // pred_check
          %p293 = pneg %p185
        $region34: #{tpu_custom_call.1} parent=11 // pred_check_branch
          %295 = sbr.rel (%p293) target = $region36
        $region35: #{tpu_custom_call.1} parent=11 // pred_region
          _
        $region36: #{tpu_custom_call.1} parent=11 // pred_fallthru
          _
        // Predicated region
        $region37: #{tpu_custom_call.1} parent=11 // pred_check
          %p296 = pneg %p206
        $region38: #{tpu_custom_call.1} parent=11 // pred_check_branch
          %298 = sbr.rel (%p296) target = $region40
        $region39: #{tpu_custom_call.1} parent=11 // pred_region
          _
        $region40: #{tpu_custom_call.1} parent=11 // pred_fallthru
          _
        // Predicated region
        $region41: #{tpu_custom_call.1} parent=11 // pred_check
          %p299 = pneg %p227
        $region42: #{tpu_custom_call.1} parent=11 // pred_check_branch
          %301 = sbr.rel (%p299) target = $region44
        $region43: #{tpu_custom_call.1} parent=11 // pred_region
          _
        $region44: #{tpu_custom_call.1} parent=11 // pred_fallthru
          _
      $region12: #{tpu_custom_call.1} parent=5 // pred_fallthru
        _
      %p302 = scmp.lt.s32.totalorder %s19, 2
      // Predicated region
      $region45: #{tpu_custom_call.1} parent=5 // pred_check
        %p303 = pneg %p302
      $region46: #{tpu_custom_call.1} parent=5 // pred_check_branch
        %305 = sbr.rel (%p303) target = $region48
      $region47: #{tpu_custom_call.1} parent=5 // pred_region
        // Predicated region
        $region49: #{tpu_custom_call.1} parent=47 // pred_check
          %p306 = pneg %p53
        $region50: #{tpu_custom_call.1} parent=47 // pred_check_branch
          %308 = sbr.rel (%p306) target = $region52
        $region51: #{tpu_custom_call.1} parent=47 // pred_region
          %s309 = smul.u32 8, %s26
          %p310 = scmp.lt.s32.totalorder %s309, 15
          %s311 = scalar_select %p310, %s309, 15
          %p312 = scmp.lt.s32.totalorder %s27, 0
          %s313 = scalar_select %p312, %s27, 0
          %s314 = sadd.s32 %s313, %s311
          %s315 = smul.addr %s314, 8
          %s316 = scalar_lea.vmem %s0, %s315
          %s317 = smul.u32 8, %s26
        $region52: #{tpu_custom_call.1} parent=47 // pred_fallthru
          _
      $region48: #{tpu_custom_call.1} parent=5 // pred_fallthru
        _
      %p318 = scmp.le.s32.totalorder 1, %s19
      %p319 = scmp.lt.s32.totalorder %s19, 3
      %p320 = pnand %p318, %p319
      %p321 = pneg %p320
      // Predicated region
      $region53: #{tpu_custom_call.1} parent=5 // pred_check
        _
      $region54: #{tpu_custom_call.1} parent=5 // pred_check_branch
        %323 = sbr.rel (%p320) target = $region56
      $region55: #{tpu_custom_call.1} parent=5 // pred_region
        %s324 = ssub.s32 %s19, 1
        // Predicated region
        $region57: #{tpu_custom_call.1} parent=55 // pred_check
          %p325 = pneg %p80
        $region58: #{tpu_custom_call.1} parent=55 // pred_check_branch
          %327 = sbr.rel (%p325) target = $region60
        $region59: #{tpu_custom_call.1} parent=55 // pred_region
          %328 = dma.done [#allocation4], 2048
        $region60: #{tpu_custom_call.1} parent=55 // pred_fallthru
          _
        %s329 = smul.u32 8, %s28
        %p330 = scmp.lt.s32.totalorder %s329, 15
        %s331 = scalar_select %p330, %s329, 15
        %p332 = scmp.lt.s32.totalorder %s29, 0
        %s333 = scalar_select %p332, %s29, 0
        %s334 = sadd.s32 %s333, %s331
        %s335 = smul.addr %s334, 8
        %s336 = scalar_lea.vmem %s0, %s335
        %p337 = pneg %p59
        %p338 = pneg %p56
        %p339 = pneg %p80
        %p340 = pneg %p77
        %p341 = pneg %p101
        %p342 = pneg %p98
        %p343 = pneg %p122
        %p344 = pneg %p119
        %p345 = pneg %p143
        %p346 = pneg %p140
        %p347 = pneg %p164
        %p348 = pneg %p161
        %p349 = pneg %p185
        %p350 = pneg %p182
        %p351 = pneg %p206
        %p352 = pneg %p203
        %p353 = pneg %p227
        %p354 = pneg %p224
        %p355 = pneg %p253
        %p356 = pneg %p250
        %s357 = sand.u32 %s240, 1
        %s358 = scalar_lea.sflag [#allocation5], %s357
        %s359 = sand.u32 %s240, 1
        %s360 = smul.addr %s359, 8
        %s361 = scalar_lea.vmem [#allocation6], %s360
        %s362 = smul.u32 8, %s28
        %p363 = scmp.lt.s32.totalorder %s362, 15
        %s364 = scalar_select %p363, %s362, 15
        %p365 = scmp.lt.s32.totalorder %s29, 0
        %s366 = scalar_select %p365, %s29, 0
        %s367 = sadd.s32 %s366, %s364
        %s368 = smul.addr %s367, 8
        %s369 = scalar_lea.vmem %s0, %s368
        %s370 = smul.u32 8, %s28
        %p371 = scmp.eq.s32.totalorder %s29, 0
        // Predicated region
        $region61: #{tpu_custom_call.1} parent=55 // pred_check
          %p372 = pneg %p371
        $region62: #{tpu_custom_call.1} parent=55 // pred_check_branch
          %374 = sbr.rel (%p372) target = $region64
        $region63: #{tpu_custom_call.1} parent=55 // pred_region
          %375 = vst [vmem:[#allocation2] sm:$0xff] 0.0
          %376 = vst [vmem:[#allocation2 + $0x8] sm:$0xff] 0.0
          %377 = vst [vmem:[#allocation2 + $0x10] sm:$0xff] 0.0
          %378 = vst [vmem:[#allocation2 + $0x18] sm:$0xff] 0.0
          %379 = vst [vmem:[#allocation2 + $0x20] sm:$0xff] 0.0
          %380 = vst [vmem:[#allocation2 + $0x28] sm:$0xff] 0.0
          %381 = vst [vmem:[#allocation2 + $0x30] sm:$0xff] 0.0
          %382 = vst [vmem:[#allocation2 + $0x38] sm:$0xff] 0.0
        $region64: #{tpu_custom_call.1} parent=55 // pred_fallthru
          _
        %v383 = vld [vmem:[%s369] sm:$0xff]
        %v384 = vld [vmem:[%s369 + $0x8] sm:$0xff]
        %v385 = vld [vmem:[%s369 + $0x10] sm:$0xff]
        %v386 = vld [vmem:[%s369 + $0x18] sm:$0xff]
        %v387 = vld [vmem:[%s369 + $0x20] sm:$0xff]
        %v388 = vld [vmem:[%s369 + $0x28] sm:$0xff]
        %v389 = vld [vmem:[%s369 + $0x30] sm:$0xff]
        %v390 = vld [vmem:[%s369 + $0x38] sm:$0xff]
        %v391 = vld [vmem:[#allocation3] sm:$0xff]
        %v392 = vld [vmem:[#allocation3 + $0x8] sm:$0xff]
        %v393 = vld [vmem:[#allocation3 + $0x10] sm:$0xff]
        %v394 = vld [vmem:[#allocation3 + $0x18] sm:$0xff]
        %v395 = vld [vmem:[#allocation3 + $0x20] sm:$0xff]
        %v396 = vld [vmem:[#allocation3 + $0x28] sm:$0xff]
        %v397 = vld [vmem:[#allocation3 + $0x30] sm:$0xff]
        %v398 = vld [vmem:[#allocation3 + $0x38] sm:$0xff]
        %v399 = vld [vmem:[#allocation3 + $0x40] sm:$0xff]
        %v400 = vld [vmem:[#allocation3 + $0x48] sm:$0xff]
        %v401 = vld [vmem:[#allocation3 + $0x50] sm:$0xff]
        %v402 = vld [vmem:[#allocation3 + $0x58] sm:$0xff]
        %v403 = vld [vmem:[#allocation3 + $0x60] sm:$0xff]
        %v404 = vld [vmem:[#allocation3 + $0x68] sm:$0xff]
        %v405 = vld [vmem:[#allocation3 + $0x70] sm:$0xff]
        %v406 = vld [vmem:[#allocation3 + $0x78] sm:$0xff]
        %407 = vmatprep.subr.mxu0 0.0
        %408 = vmatpush1.msra.mxu0 %v406
        %409 = vmatprep.subr.mxu0 0.0
        %410 = vmatpush1.msra.mxu0 %v405
        %411 = vmatprep.subr.mxu0 0.0
        %412 = vmatpush1.msra.mxu0 %v404
        %413 = vmatprep.subr.mxu0 0.0
        %414 = vmatpush1.msra.mxu0 %v403
        %415 = vmatprep.subr.mxu0 0.0
        %416 = vmatpush1.msra.mxu0 %v402
        %417 = vmatprep.subr.mxu0 0.0
        %418 = vmatpush1.msra.mxu0 %v401
        %419 = vmatprep.subr.mxu0 0.0
        %420 = vmatpush1.msra.mxu0 %v400
        %421 = vmatprep.subr.mxu0 0.0
        %422 = vmatpush1.msra.mxu0 %v399
        %423 = vmatprep.subr.mxu0 0.0
        %424 = vmatpush1.msra.mxu0 %v398
        %425 = vmatprep.subr.mxu0 0.0
        %426 = vmatpush1.msra.mxu0 %v397
        %427 = vmatprep.subr.mxu0 0.0
        %428 = vmatpush1.msra.mxu0 %v396
        %429 = vmatprep.subr.mxu0 0.0
        %430 = vmatpush1.msra.mxu0 %v395
        %431 = vmatprep.subr.mxu0 0.0
        %432 = vmatpush1.msra.mxu0 %v394
        %433 = vmatprep.subr.mxu0 0.0
        %434 = vmatpush1.msra.mxu0 %v393
        %435 = vmatprep.subr.mxu0 0.0
        %436 = vmatpush1.msra.mxu0 %v392
        %437 = vmatprep.subr.mxu0 0.0
        %438 = vmatpush1.msra.mxu0 %v391
        %439 = vmatprep.subr.mxu0 0.0
        %440 = vmatpush2.msra.mxu0 0.0
        %441 = vmatprep.subr.mxu0 0.0
        %442 = vmatpush2.msra.mxu0 0.0
        %443 = vmatprep.subr.mxu0 0.0
        %444 = vmatpush2.msra.mxu0 0.0
        %445 = vmatprep.subr.mxu0 0.0
        %446 = vmatpush2.msra.mxu0 0.0
        %447 = vmatprep.subr.mxu0 0.0
        %448 = vmatpush2.msra.mxu0 0.0
        %449 = vmatprep.subr.mxu0 0.0
        %450 = vmatpush2.msra.mxu0 0.0
        %451 = vmatprep.subr.mxu0 0.0
        %452 = vmatpush2.msra.mxu0 0.0
        %453 = vmatprep.subr.mxu0 0.0
        %454 = vmatpush2.msra.mxu0 0.0
        %455 = vmatprep.subr.mxu0 0.0
        %456 = vmatpush2.msra.mxu0 0.0
        %457 = vmatprep.subr.mxu0 0.0
        %458 = vmatpush2.msra.mxu0 0.0
        %459 = vmatprep.subr.mxu0 0.0
        %460 = vmatpush2.msra.mxu0 0.0
        %461 = vmatprep.subr.mxu0 0.0
        %462 = vmatpush2.msra.mxu0 0.0
        %463 = vmatprep.subr.mxu0 0.0
        %464 = vmatpush2.msra.mxu0 0.0
        %465 = vmatprep.subr.mxu0 0.0
        %466 = vmatpush2.msra.mxu0 0.0
        %467 = vmatprep.subr.mxu0 0.0
        %468 = vmatpush2.msra.mxu0 0.0
        %469 = vmatprep.subr.mxu0 0.0
        %470 = vmatpush2.msra.mxu0 0.0
        %471 = vmatprep.mubr.f32.mxu0 0.0
        %472 = vmatmul.mubr.f32.gmra.mxu0 %v383
        %v473 = vpop.f32.mrf.mxu0
        %v474 = vadd.f32 0.0, %v473
        %v475 = vpop.f32.mrf.mxu0
        %476 = vmatprep.mubr.f32.mxu0 0.0
        %477 = vmatmul.mubr.f32.gmra.mxu0 %v384
        %v478 = vpop.f32.mrf.mxu0
        %v479 = vadd.f32 0.0, %v478
        %v480 = vpop.f32.mrf.mxu0
        %481 = vmatprep.mubr.f32.mxu0 0.0
        %482 = vmatmul.mubr.f32.gmra.mxu0 %v385
        %v483 = vpop.f32.mrf.mxu0
        %v484 = vadd.f32 0.0, %v483
        %v485 = vpop.f32.mrf.mxu0
        %486 = vmatprep.mubr.f32.mxu0 0.0
        %487 = vmatmul.mubr.f32.gmra.mxu0 %v386
        %v488 = vpop.f32.mrf.mxu0
        %v489 = vadd.f32 0.0, %v488
        %v490 = vpop.f32.mrf.mxu0
        %491 = vmatprep.mubr.f32.mxu0 0.0
        %492 = vmatmul.mubr.f32.gmra.mxu0 %v387
        %v493 = vpop.f32.mrf.mxu0
        %v494 = vadd.f32 0.0, %v493
        %v495 = vpop.f32.mrf.mxu0
        %496 = vmatprep.mubr.f32.mxu0 0.0
        %497 = vmatmul.mubr.f32.gmra.mxu0 %v388
        %v498 = vpop.f32.mrf.mxu0
        %v499 = vadd.f32 0.0, %v498
        %v500 = vpop.f32.mrf.mxu0
        %501 = vmatprep.mubr.f32.mxu0 0.0
        %502 = vmatmul.mubr.f32.gmra.mxu0 %v389
        %v503 = vpop.f32.mrf.mxu0
        %v504 = vadd.f32 0.0, %v503
        %v505 = vpop.f32.mrf.mxu0
        %506 = vmatprep.mubr.f32.mxu0 0.0
        %507 = vmatmul.mubr.f32.gmra.mxu0 %v390
        %v508 = vpop.f32.mrf.mxu0
        %v509 = vadd.f32 0.0, %v508
        %v510 = vpop.f32.mrf.mxu0
        %511 = vdwg.mxu0
        %v512 = vmul.f32 %v474, %v474
        %v513 = vmul.f32 %v479, %v479
        %v514 = vmul.f32 %v484, %v484
        %v515 = vmul.f32 %v489, %v489
        %v516 = vmul.f32 %v494, %v494
        %v517 = vmul.f32 %v499, %v499
        %v518 = vmul.f32 %v504, %v504
        %v519 = vmul.f32 %v509, %v509
        %v520 = vld [vmem:[#allocation2] sm:$0xff]
        %v521 = vld [vmem:[#allocation2 + $0x8] sm:$0xff]
        %v522 = vld [vmem:[#allocation2 + $0x10] sm:$0xff]
        %v523 = vld [vmem:[#allocation2 + $0x18] sm:$0xff]
        %v524 = vld [vmem:[#allocation2 + $0x20] sm:$0xff]
        %v525 = vld [vmem:[#allocation2 + $0x28] sm:$0xff]
        %v526 = vld [vmem:[#allocation2 + $0x30] sm:$0xff]
        %v527 = vld [vmem:[#allocation2 + $0x38] sm:$0xff]
        %v528 = vadd.f32 %v512, 0.0
        %v529 = vadd.f32 %v513, 0.0
        %v530 = vadd.f32 %v514, 0.0
        %v531 = vadd.f32 %v515, 0.0
        %v532 = vadd.f32 %v516, 0.0
        %v533 = vadd.f32 %v517, 0.0
        %v534 = vadd.f32 %v518, 0.0
        %v535 = vadd.f32 %v519, 0.0
        %v536 = vadd.f32 %v520, %v528
        %v537 = vadd.f32 %v521, %v529
        %v538 = vadd.f32 %v522, %v530
        %v539 = vadd.f32 %v523, %v531
        %v540 = vadd.f32 %v524, %v532
        %v541 = vadd.f32 %v525, %v533
        %v542 = vadd.f32 %v526, %v534
        %v543 = vadd.f32 %v527, %v535
        %544 = vst [vmem:[#allocation2] sm:$0xff] %v536
        %545 = vst [vmem:[#allocation2 + $0x8] sm:$0xff] %v537
        %546 = vst [vmem:[#allocation2 + $0x10] sm:$0xff] %v538
        %547 = vst [vmem:[#allocation2 + $0x18] sm:$0xff] %v539
        %548 = vst [vmem:[#allocation2 + $0x20] sm:$0xff] %v540
        %549 = vst [vmem:[#allocation2 + $0x28] sm:$0xff] %v541
        %550 = vst [vmem:[#allocation2 + $0x30] sm:$0xff] %v542
        %551 = vst [vmem:[#allocation2 + $0x38] sm:$0xff] %v543
        // Predicated region
        $region65: #{tpu_custom_call.1} parent=55 // pred_check
          %p552 = pneg %p371
        $region66: #{tpu_custom_call.1} parent=55 // pred_check_branch
          %554 = sbr.rel (%p552) target = $region68
        $region67: #{tpu_custom_call.1} parent=55 // pred_region
          %v555 = vld [vmem:[#allocation2] sm:$0xff]
          %v556 = vld [vmem:[#allocation2 + $0x8] sm:$0xff]
          %v557 = vld [vmem:[#allocation2 + $0x10] sm:$0xff]
          %v558 = vld [vmem:[#allocation2 + $0x18] sm:$0xff]
          %v559 = vld [vmem:[#allocation2 + $0x20] sm:$0xff]
          %v560 = vld [vmem:[#allocation2 + $0x28] sm:$0xff]
          %v561 = vld [vmem:[#allocation2 + $0x30] sm:$0xff]
          %v562 = vld [vmem:[#allocation2 + $0x38] sm:$0xff]
          %v563 = vrot.slane %v555, 4
          %v564 = vadd.f32 %v555, %v563
          %v565 = vrot.slane %v564, 2
          %v566 = vadd.f32 %v564, %v565
          %v567 = vrot.slane %v566, 1
          %v568 = vadd.f32 %v566, %v567
          %v569 = vrot.slane %v556, 4
          %v570 = vadd.f32 %v556, %v569
          %v571 = vrot.slane %v570, 2
          %v572 = vadd.f32 %v570, %v571
          %v573 = vrot.slane %v572, 1
          %v574 = vadd.f32 %v572, %v573
          %v575 = vrot.slane %v557, 4
          %v576 = vadd.f32 %v557, %v575
          %v577 = vrot.slane %v576, 2
          %v578 = vadd.f32 %v576, %v577
          %v579 = vrot.slane %v578, 1
          %v580 = vadd.f32 %v578, %v579
          %v581 = vrot.slane %v558, 4
          %v582 = vadd.f32 %v558, %v581
          %v583 = vrot.slane %v582, 2
          %v584 = vadd.f32 %v582, %v583
          %v585 = vrot.slane %v584, 1
          %v586 = vadd.f32 %v584, %v585
          %v587 = vrot.slane %v559, 4
          %v588 = vadd.f32 %v559, %v587
          %v589 = vrot.slane %v588, 2
          %v590 = vadd.f32 %v588, %v589
          %v591 = vrot.slane %v590, 1
          %v592 = vadd.f32 %v590, %v591
          %v593 = vrot.slane %v560, 4
          %v594 = vadd.f32 %v560, %v593
          %v595 = vrot.slane %v594, 2
          %v596 = vadd.f32 %v594, %v595
          %v597 = vrot.slane %v596, 1
          %v598 = vadd.f32 %v596, %v597
          %v599 = vrot.slane %v561, 4
          %v600 = vadd.f32 %v561, %v599
          %v601 = vrot.slane %v600, 2
          %v602 = vadd.f32 %v600, %v601
          %v603 = vrot.slane %v602, 1
          %v604 = vadd.f32 %v602, %v603
          %v605 = vrot.slane %v562, 4
          %v606 = vadd.f32 %v562, %v605
          %v607 = vrot.slane %v606, 2
          %v608 = vadd.f32 %v606, %v607
          %v609 = vrot.slane %v608, 1
          %v610 = vadd.f32 %v608, %v609
          %v611 = vld [vmem:[%s2] sm:$0xff]
          %v612 = vld [vmem:[%s2 + $0x8] sm:$0xff]
          %v613 = vld [vmem:[%s2 + $0x10] sm:$0xff]
          %v614 = vld [vmem:[%s2 + $0x18] sm:$0xff]
          %v615 = vld [vmem:[%s2 + $0x20] sm:$0xff]
          %v616 = vld [vmem:[%s2 + $0x28] sm:$0xff]
          %v617 = vld [vmem:[%s2 + $0x30] sm:$0xff]
          %v618 = vld [vmem:[%s2 + $0x38] sm:$0xff]
          %v619 = vld [vmem:[%s2 + $0x40] sm:$0xff]
          %v620 = vld [vmem:[%s2 + $0x48] sm:$0xff]
          %v621 = vld [vmem:[%s2 + $0x50] sm:$0xff]
          %v622 = vld [vmem:[%s2 + $0x58] sm:$0xff]
          %v623 = vld [vmem:[%s2 + $0x60] sm:$0xff]
          %v624 = vld [vmem:[%s2 + $0x68] sm:$0xff]
          %v625 = vld [vmem:[%s2 + $0x70] sm:$0xff]
          %v626 = vld [vmem:[%s2 + $0x78] sm:$0xff]
          %vm635 = vcmask 1041409
          %v636 = vsel %vm635, %v574, %v568
          %vm637 = vcmask 1042434
          %v638 = vsel %vm637, %v580, %v636
          %vm639 = vcmask 1043459
          %v640 = vsel %vm639, %v586, %v638
          %vm641 = vcmask 1044484
          %v642 = vsel %vm641, %v592, %v640
          %vm643 = vcmask 1045509
          %v644 = vsel %vm643, %v598, %v642
          %vm645 = vcmask 1046534
          %v646 = vsel %vm645, %v604, %v644
          %vm647 = vcmask 1047559
          %v648 = vsel %vm647, %v610, %v646
          %650 = vmatprep.subr.mxu0 0.0
          %651 = vmatpush1.msra.mxu0 %v626
          %652 = vmatprep.subr.mxu0 0.0
          %653 = vmatpush1.msra.mxu0 %v625
          %654 = vmatprep.subr.mxu0 0.0
          %655 = vmatpush1.msra.mxu0 %v624
          %656 = vmatprep.subr.mxu0 0.0
          %657 = vmatpush1.msra.mxu0 %v623
          %658 = vmatprep.subr.mxu0 0.0
          %659 = vmatpush1.msra.mxu0 %v622
          %660 = vmatprep.subr.mxu0 0.0
          %661 = vmatpush1.msra.mxu0 %v621
          %662 = vmatprep.subr.mxu0 0.0
          %663 = vmatpush1.msra.mxu0 %v620
          %664 = vmatprep.subr.mxu0 0.0
          %665 = vmatpush1.msra.mxu0 %v619
          %666 = vmatprep.subr.mxu0 0.0
          %667 = vmatpush1.msra.mxu0 %v618
          %668 = vmatprep.subr.mxu0 0.0
          %669 = vmatpush1.msra.mxu0 %v617
          %670 = vmatprep.subr.mxu0 0.0
          %671 = vmatpush1.msra.mxu0 %v616
          %672 = vmatprep.subr.mxu0 0.0
          %673 = vmatpush1.msra.mxu0 %v615
          %674 = vmatprep.subr.mxu0 0.0
          %675 = vmatpush1.msra.mxu0 %v614
          %676 = vmatprep.subr.mxu0 0.0
          %677 = vmatpush1.msra.mxu0 %v613
          %678 = vmatprep.subr.mxu0 0.0
          %679 = vmatpush1.msra.mxu0 %v612
          %680 = vmatprep.subr.mxu0 0.0
          %681 = vmatpush1.msra.mxu0 %v611
          %682 = vmatprep.subr.mxu0 0.0
          %683 = vmatpush2.msra.mxu0 0.0
          %684 = vmatprep.subr.mxu0 0.0
          %685 = vmatpush2.msra.mxu0 0.0
          %686 = vmatprep.subr.mxu0 0.0
          %687 = vmatpush2.msra.mxu0 0.0
          %688 = vmatprep.subr.mxu0 0.0
          %689 = vmatpush2.msra.mxu0 0.0
          %690 = vmatprep.subr.mxu0 0.0
          %691 = vmatpush2.msra.mxu0 0.0
          %692 = vmatprep.subr.mxu0 0.0
          %693 = vmatpush2.msra.mxu0 0.0
          %694 = vmatprep.subr.mxu0 0.0
          %695 = vmatpush2.msra.mxu0 0.0
          %696 = vmatprep.subr.mxu0 0.0
          %697 = vmatpush2.msra.mxu0 0.0
          %698 = vmatprep.subr.mxu0 0.0
          %699 = vmatpush2.msra.mxu0 0.0
          %700 = vmatprep.subr.mxu0 0.0
          %701 = vmatpush2.msra.mxu0 0.0
          %702 = vmatprep.subr.mxu0 0.0
          %703 = vmatpush2.msra.mxu0 0.0
          %704 = vmatprep.subr.mxu0 0.0
          %705 = vmatpush2.msra.mxu0 0.0
          %706 = vmatprep.subr.mxu0 0.0
          %707 = vmatpush2.msra.mxu0 0.0
          %708 = vmatprep.subr.mxu0 0.0
          %709 = vmatpush2.msra.mxu0 0.0
          %710 = vmatprep.subr.mxu0 0.0
          %711 = vmatpush2.msra.mxu0 0.0
          %712 = vmatprep.subr.mxu0 0.0
          %713 = vmatpush2.msra.mxu0 0.0
          %714 = vmatprep.mubr.f32.mxu0 0.0
          %715 = vmatmul.mubr.f32.gmra.mxu0 %v648
          %v716 = vpop.f32.mrf.mxu0
          %v717 = vadd.f32 0.0, %v716
          %v718 = vpop.f32.mrf.mxu0
          %719 = vdwg.mxu0
          %v720 = vadd.f32 %v717, 1e-06
          %v721 = vrcp.pop %v720
          %v722 = vmul.f32 %v717, %v721
          %v723 = vld [vmem:[%s3] sm:$0xff]
          %v724 = vld [vmem:[%s3 + $0x8] sm:$0xff]
          %v725 = vld [vmem:[%s4] sm:$0x1]
          %v727 = vlaneseq
          %v728 = vshrl.u32 %v727, 7
          %v729 = vsub.s32 0, %v728
          %v730 = vrot.slane %v725, %v729
          %vm732 = vcmask 130048
          %v734 = vsel %vm732, %v722, 0
          %736 = vmatprep.subr.mxu0 0.0
          %737 = vmatpush1.msra.mxu0 0.0
          %738 = vmatprep.subr.mxu0 0.0
          %739 = vmatpush1.msra.mxu0 0.0
          %740 = vmatprep.subr.mxu0 0.0
          %741 = vmatpush1.msra.mxu0 0.0
          %742 = vmatprep.subr.mxu0 0.0
          %743 = vmatpush1.msra.mxu0 0.0
          %744 = vmatprep.subr.mxu0 0.0
          %745 = vmatpush1.msra.mxu0 0.0
          %746 = vmatprep.subr.mxu0 0.0
          %747 = vmatpush1.msra.mxu0 0.0
          %748 = vmatprep.subr.mxu0 0.0
          %749 = vmatpush1.msra.mxu0 0.0
          %750 = vmatprep.subr.mxu0 0.0
          %751 = vmatpush1.msra.mxu0 0.0
          %752 = vmatprep.subr.mxu0 0.0
          %753 = vmatpush1.msra.mxu0 0.0
          %754 = vmatprep.subr.mxu0 0.0
          %755 = vmatpush1.msra.mxu0 0.0
          %756 = vmatprep.subr.mxu0 0.0
          %757 = vmatpush1.msra.mxu0 0.0
          %758 = vmatprep.subr.mxu0 0.0
          %759 = vmatpush1.msra.mxu0 0.0
          %760 = vmatprep.subr.mxu0 0.0
          %761 = vmatpush1.msra.mxu0 0.0
          %762 = vmatprep.subr.mxu0 0.0
          %763 = vmatpush1.msra.mxu0 0.0
          %764 = vmatprep.subr.mxu0 0.0
          %765 = vmatpush1.msra.mxu0 %v724
          %766 = vmatprep.subr.mxu0 0.0
          %767 = vmatpush1.msra.mxu0 %v723
          %768 = vmatprep.subr.mxu0 0.0
          %769 = vmatpush2.msra.mxu0 0.0
          %770 = vmatprep.subr.mxu0 0.0
          %771 = vmatpush2.msra.mxu0 0.0
          %772 = vmatprep.subr.mxu0 0.0
          %773 = vmatpush2.msra.mxu0 0.0
          %774 = vmatprep.subr.mxu0 0.0
          %775 = vmatpush2.msra.mxu0 0.0
          %776 = vmatprep.subr.mxu0 0.0
          %777 = vmatpush2.msra.mxu0 0.0
          %778 = vmatprep.subr.mxu0 0.0
          %779 = vmatpush2.msra.mxu0 0.0
          %780 = vmatprep.subr.mxu0 0.0
          %781 = vmatpush2.msra.mxu0 0.0
          %782 = vmatprep.subr.mxu0 0.0
          %783 = vmatpush2.msra.mxu0 0.0
          %784 = vmatprep.subr.mxu0 0.0
          %785 = vmatpush2.msra.mxu0 0.0
          %786 = vmatprep.subr.mxu0 0.0
          %787 = vmatpush2.msra.mxu0 0.0
          %788 = vmatprep.subr.mxu0 0.0
          %789 = vmatpush2.msra.mxu0 0.0
          %790 = vmatprep.subr.mxu0 0.0
          %791 = vmatpush2.msra.mxu0 0.0
          %792 = vmatprep.subr.mxu0 0.0
          %793 = vmatpush2.msra.mxu0 0.0
          %794 = vmatprep.subr.mxu0 0.0
          %795 = vmatpush2.msra.mxu0 0.0
          %796 = vmatprep.subr.mxu0 0.0
          %797 = vmatpush2.msra.mxu0 0.0
          %798 = vmatprep.subr.mxu0 0.0
          %799 = vmatpush2.msra.mxu0 0.0
          %800 = vmatprep.mubr.f32.mxu0 0.0
          %801 = vmatmul.mubr.f32.gmra.mxu0 %v734
          %v802 = vpop.f32.mrf.mxu0
          %v803 = vadd.f32 %v730, %v802
          %v804 = vpop.f32.mrf.mxu0
          %805 = vdwg.mxu0
          %vm806 = vcmp.gt.f32.partialorder %v803, 0.0
          %v807 = vmul.f32 %v803, 0.01
          %v808 = vsel %vm806, %v803, %v807
          %v809 = vld [vmem:[%s5] sm:$0xff]
          %v810 = vld [vmem:[%s5 + $0x8] sm:$0xff]
          %v811 = vld [vmem:[%s6] sm:$0x1]
          %v813 = vlaneseq
          %v814 = vshrl.u32 %v813, 7
          %v815 = vsub.s32 0, %v814
          %v816 = vrot.slane %v811, %v815
          %v819 = vsel %vm732, %v808, 0
          %821 = vmatprep.subr.mxu0 0.0
          %822 = vmatpush1.msra.mxu0 0.0
          %823 = vmatprep.subr.mxu0 0.0
          %824 = vmatpush1.msra.mxu0 0.0
          %825 = vmatprep.subr.mxu0 0.0
          %826 = vmatpush1.msra.mxu0 0.0
          %827 = vmatprep.subr.mxu0 0.0
          %828 = vmatpush1.msra.mxu0 0.0
          %829 = vmatprep.subr.mxu0 0.0
          %830 = vmatpush1.msra.mxu0 0.0
          %831 = vmatprep.subr.mxu0 0.0
          %832 = vmatpush1.msra.mxu0 0.0
          %833 = vmatprep.subr.mxu0 0.0
          %834 = vmatpush1.msra.mxu0 0.0
          %835 = vmatprep.subr.mxu0 0.0
          %836 = vmatpush1.msra.mxu0 0.0
          %837 = vmatprep.subr.mxu0 0.0
          %838 = vmatpush1.msra.mxu0 0.0
          %839 = vmatprep.subr.mxu0 0.0
          %840 = vmatpush1.msra.mxu0 0.0
          %841 = vmatprep.subr.mxu0 0.0
          %842 = vmatpush1.msra.mxu0 0.0
          %843 = vmatprep.subr.mxu0 0.0
          %844 = vmatpush1.msra.mxu0 0.0
          %845 = vmatprep.subr.mxu0 0.0
          %846 = vmatpush1.msra.mxu0 0.0
          %847 = vmatprep.subr.mxu0 0.0
          %848 = vmatpush1.msra.mxu0 0.0
          %849 = vmatprep.subr.mxu0 0.0
          %850 = vmatpush1.msra.mxu0 %v810
          %851 = vmatprep.subr.mxu0 0.0
          %852 = vmatpush1.msra.mxu0 %v809
          %853 = vmatprep.subr.mxu0 0.0
          %854 = vmatpush2.msra.mxu0 0.0
          %855 = vmatprep.subr.mxu0 0.0
          %856 = vmatpush2.msra.mxu0 0.0
          %857 = vmatprep.subr.mxu0 0.0
          %858 = vmatpush2.msra.mxu0 0.0
          %859 = vmatprep.subr.mxu0 0.0
          %860 = vmatpush2.msra.mxu0 0.0
          %861 = vmatprep.subr.mxu0 0.0
          %862 = vmatpush2.msra.mxu0 0.0
          %863 = vmatprep.subr.mxu0 0.0
          %864 = vmatpush2.msra.mxu0 0.0
          %865 = vmatprep.subr.mxu0 0.0
          %866 = vmatpush2.msra.mxu0 0.0
          %867 = vmatprep.subr.mxu0 0.0
          %868 = vmatpush2.msra.mxu0 0.0
          %869 = vmatprep.subr.mxu0 0.0
          %870 = vmatpush2.msra.mxu0 0.0
          %871 = vmatprep.subr.mxu0 0.0
          %872 = vmatpush2.msra.mxu0 0.0
          %873 = vmatprep.subr.mxu0 0.0
          %874 = vmatpush2.msra.mxu0 0.0
          %875 = vmatprep.subr.mxu0 0.0
          %876 = vmatpush2.msra.mxu0 0.0
          %877 = vmatprep.subr.mxu0 0.0
          %878 = vmatpush2.msra.mxu0 0.0
          %879 = vmatprep.subr.mxu0 0.0
          %880 = vmatpush2.msra.mxu0 0.0
          %881 = vmatprep.subr.mxu0 0.0
          %882 = vmatpush2.msra.mxu0 0.0
          %883 = vmatprep.subr.mxu0 0.0
          %884 = vmatpush2.msra.mxu0 0.0
          %885 = vmatprep.mubr.f32.mxu0 0.0
          %886 = vmatmul.mubr.f32.gmra.mxu0 %v819
          %v887 = vpop.f32.mrf.mxu0
          %v888 = vadd.f32 %v816, %v887
          %v889 = vpop.f32.mrf.mxu0
          %890 = vdwg.mxu0
          %vm891 = vcmp.gt.f32.partialorder %v888, 0.0
          %v892 = vmul.f32 %v888, 0.01
          %v893 = vsel %vm891, %v888, %v892
          %v894 = vld [vmem:[%s7] sm:$0xff]
          %v895 = vld [vmem:[%s8] sm:$0x1]
          %v897 = vlaneseq
          %v898 = vshrl.u32 %v897, 7
          %v899 = vsub.s32 0, %v898
          %v900 = vrot.slane %v895, %v899
          %vm902 = vcmask 64512
          %v904 = vsel %vm902, %v893, 0
          %906 = vmatprep.subr.mxu0 0.0
          %907 = vmatpush1.msra.mxu0 0.0
          %908 = vmatprep.subr.mxu0 0.0
          %909 = vmatpush1.msra.mxu0 0.0
          %910 = vmatprep.subr.mxu0 0.0
          %911 = vmatpush1.msra.mxu0 0.0
          %912 = vmatprep.subr.mxu0 0.0
          %913 = vmatpush1.msra.mxu0 0.0
          %914 = vmatprep.subr.mxu0 0.0
          %915 = vmatpush1.msra.mxu0 0.0
          %916 = vmatprep.subr.mxu0 0.0
          %917 = vmatpush1.msra.mxu0 0.0
          %918 = vmatprep.subr.mxu0 0.0
          %919 = vmatpush1.msra.mxu0 0.0
          %920 = vmatprep.subr.mxu0 0.0
          %921 = vmatpush1.msra.mxu0 0.0
          %922 = vmatprep.subr.mxu0 0.0
          %923 = vmatpush1.msra.mxu0 0.0
          %924 = vmatprep.subr.mxu0 0.0
          %925 = vmatpush1.msra.mxu0 0.0
          %926 = vmatprep.subr.mxu0 0.0
          %927 = vmatpush1.msra.mxu0 0.0
          %928 = vmatprep.subr.mxu0 0.0
          %929 = vmatpush1.msra.mxu0 0.0
          %930 = vmatprep.subr.mxu0 0.0
          %931 = vmatpush1.msra.mxu0 0.0
          %932 = vmatprep.subr.mxu0 0.0
          %933 = vmatpush1.msra.mxu0 0.0
          %934 = vmatprep.subr.mxu0 0.0
          %935 = vmatpush1.msra.mxu0 0.0
          %936 = vmatprep.subr.mxu0 0.0
          %937 = vmatpush1.msra.mxu0 %v894
          %938 = vmatprep.subr.mxu0 0.0
          %939 = vmatpush2.msra.mxu0 0.0
          %940 = vmatprep.subr.mxu0 0.0
          %941 = vmatpush2.msra.mxu0 0.0
          %942 = vmatprep.subr.mxu0 0.0
          %943 = vmatpush2.msra.mxu0 0.0
          %944 = vmatprep.subr.mxu0 0.0
          %945 = vmatpush2.msra.mxu0 0.0
          %946 = vmatprep.subr.mxu0 0.0
          %947 = vmatpush2.msra.mxu0 0.0
          %948 = vmatprep.subr.mxu0 0.0
          %949 = vmatpush2.msra.mxu0 0.0
          %950 = vmatprep.subr.mxu0 0.0
          %951 = vmatpush2.msra.mxu0 0.0
          %952 = vmatprep.subr.mxu0 0.0
          %953 = vmatpush2.msra.mxu0 0.0
          %954 = vmatprep.subr.mxu0 0.0
          %955 = vmatpush2.msra.mxu0 0.0
          %956 = vmatprep.subr.mxu0 0.0
          %957 = vmatpush2.msra.mxu0 0.0
          %958 = vmatprep.subr.mxu0 0.0
          %959 = vmatpush2.msra.mxu0 0.0
          %960 = vmatprep.subr.mxu0 0.0
          %961 = vmatpush2.msra.mxu0 0.0
          %962 = vmatprep.subr.mxu0 0.0
          %963 = vmatpush2.msra.mxu0 0.0
          %964 = vmatprep.subr.mxu0 0.0
          %965 = vmatpush2.msra.mxu0 0.0
          %966 = vmatprep.subr.mxu0 0.0
          %967 = vmatpush2.msra.mxu0 0.0
          %968 = vmatprep.subr.mxu0 0.0
          %969 = vmatpush2.msra.mxu0 0.0
          %970 = vmatprep.mubr.f32.mxu0 0.0
          %971 = vmatmul.mubr.f32.gmra.mxu0 %v904
          %v972 = vpop.f32.mrf.mxu0
          %v973 = vadd.f32 %v900, %v972
          %v974 = vpop.f32.mrf.mxu0
          %975 = vdwg.mxu0
          %976 = vst.msk [vmem:[%s361] sm:$0xff] %vm732, %v973
        $region68: #{tpu_custom_call.1} parent=55 // pred_fallthru
          _
        %s977 = sand.u32 %s240, 1
        %s978 = scalar_lea.sflag [#allocation5], %s977
        %s979 = sand.u32 %s240, 1
        %s980 = smul.addr %s979, 8
        %s981 = scalar_lea.vmem [#allocation6], %s980
        // Predicated region
        $region69: #{tpu_custom_call.1} parent=55 // pred_check
          %p982 = pneg %p250
        $region70: #{tpu_custom_call.1} parent=55 // pred_check_branch
          %984 = sbr.rel (%p982) target = $region72
        $region71: #{tpu_custom_call.1} parent=55 // pred_region
          %s986 = ssub.s32 128, 128
          %987 = vsyncadd %s978, %s986
          %s988 = smul.addr %s28, 128
          %s989 = scalar_lea.hbm %s9, %s988
          %s991 = sshll.u32 %s981, 4
          %s992 = int_to_ptr.vmem [resolvable:$true] %s991
          %994 = dma.vmem_to_hbm [thread:$0]  %s992, 128, %s989, %s978
        $region72: #{tpu_custom_call.1} parent=55 // pred_fallthru
          _
      $region56: #{tpu_custom_call.1} parent=5 // pred_fallthru
        _
      %p995 = scmp.le.s32.totalorder 2, %s19
      // Predicated region
      $region73: #{tpu_custom_call.1} parent=5 // pred_check
        %p996 = pneg %p995
      $region74: #{tpu_custom_call.1} parent=5 // pred_check_branch
        %998 = sbr.rel (%p996) target = $region76
      $region75: #{tpu_custom_call.1} parent=5 // pred_region
        %s999 = ssub.s32 %s19, 2
        // Predicated region
        $region77: #{tpu_custom_call.1} parent=75 // pred_check
          %p1000 = pneg %p256
        $region78: #{tpu_custom_call.1} parent=75 // pred_check_branch
          %1002 = sbr.rel (%p1000) target = $region80
        $region79: #{tpu_custom_call.1} parent=75 // pred_region
          %s1003 = sand.u32 %s241, 1
          %s1004 = scalar_lea.sflag [#allocation5], %s1003
          %s1005 = sand.u32 %s241, 1
          %s1006 = smul.addr %s1005, 8
          %s1007 = scalar_lea.vmem [#allocation6], %s1006
          %1008 = dma.done %s1004, 128
        $region80: #{tpu_custom_call.1} parent=75 // pred_fallthru
          _
      $region76: #{tpu_custom_call.1} parent=5 // pred_fallthru
        _
    $region6: #{tpu_custom_call.1} parent=1 // loop_footer
      %s23 = sadd.s32 1, %s19
    $region7: #{tpu_custom_call.1} parent=1 // loop_footer_branch
      %18 = sbr.rel target = $region3
    $region8: #{tpu_custom_call.1} parent=1 // loop_exit
      _
    %1009 = vsyncpa [#allocation4], 1
    %s1010 = scalar_lea.sflag [#allocation4], 1
    %1011 = vsyncpa %s1010, 1
    %1012 = vsyncpa [#allocation5], 1
    %s1013 = scalar_lea.sflag [#allocation5], 1
    %1014 = vsyncpa %s1013, 1

</llo_original>
